<compile_context>
chip_gen: v5e
topology: v5e:2x2
jax: 0.10.0
libtpu: 0.0.40
codegen_flags: <defaults>
</compile_context>

<pallas_src>
import functools

import jax
import jax.numpy as jnp
from jax.experimental import pallas as pl
from jax.experimental.pallas import tpu as pltpu

LN_EPS = 1e-5  # torch.nn.LayerNorm default


def _round_up(a: int, b: int) -> int:
    return (a + b - 1) // b * b


def _cat_nonlin_kernel(x_ref, w1_ref, b1_ref, w2_ref, b2_ref,
                       gamma_ref, beta_ref, o_ref):
    # x_ref   : (TILE_B, arit*dim)
    # w1_ref  : (2*dim, arit*dim)   -- PyTorch Linear weight, NOT transposed
    # b1_ref  : (1, 2*dim)
    # w2_ref  : (dim, 2*dim)        -- PyTorch Linear weight, NOT transposed
    # b2_ref  : (1, dim)
    # gamma_ref / beta_ref : (1, dim)
    # o_ref   : (TILE_B, dim)
    x = x_ref[...].astype(jnp.float32)
    w1 = w1_ref[...].astype(jnp.float32)
    b1 = b1_ref[...].astype(jnp.float32)
    w2 = w2_ref[...].astype(jnp.float32)
    b2 = b2_ref[...].astype(jnp.float32)
    gamma = gamma_ref[...].astype(jnp.float32)
    beta = beta_ref[...].astype(jnp.float32)

    # first Linear: x @ W1^T  (MXU, f32 accumulate), then tanh (EUP slot)
    h = jax.lax.dot_general(x, w1, (((1,), (1,)), ((), ())),
                            preferred_element_type=jnp.float32) + b1
    h = jnp.tanh(h)

    # second Linear: h @ W2^T
    z = jax.lax.dot_general(h, w2, (((1,), (1,)), ((), ())),
                            preferred_element_type=jnp.float32) + b2

    # LayerNorm over the feature axis (per-row, so padded rows are independent)
    mean = jnp.mean(z, axis=-1, keepdims=True)
    cent = z - mean
    var = jnp.mean(cent * cent, axis=-1, keepdims=True)
    y = cent * jax.lax.rsqrt(var + LN_EPS) * gamma + beta

    o_ref[...] = y.astype(o_ref.dtype)


@functools.partial(jax.jit, static_argnames=("arit", "tile_b"))
def cat_and_nonlinear_binary(args, w1, b1, w2, b2, gamma, beta, *,
                             arit: int = 2, tile_b: int = 1024):
    """args: (N, dim); weights in PyTorch Linear convention:
    w1 (2*dim, arit*dim), b1 (2*dim,), w2 (dim, 2*dim), b2 (dim,),
    gamma/beta (dim,)."""
    n, dim = args.shape
    x = args.reshape(n // arit, arit * dim) if arit == 2 else args
    b_rows, in_dim = x.shape
    hid = w1.shape[0]        # 2*dim
    out_dim = w2.shape[0]    # dim

    # Row tile: large (amortizes per-grid-step overhead, keeps the MXU fed),
    # multiple of 8 sublanes, never larger than the (sublane-padded) batch.
    # Sized well within the 32 MiB scoped-VMEM default even on v7x
    # (2 bufs x (x tile + out tile) ~ 0.75 MiB at tile_b=1024, dim=32).
    tb = int(min(tile_b, _round_up(b_rows, 8)))
    tb = max(8, (tb // 8) * 8)
    padded = _round_up(b_rows, tb)
    if padded != b_rows:
        x = jnp.pad(x, ((0, padded - b_rows), (0, 0)))
    grid = (padded // tb,)

    flops = 2 * padded * (in_dim * hid + hid * out_dim)
    bytes_accessed = 4 * (padded * (in_dim + out_dim)
                          + hid * in_dim + out_dim * hid
                          + hid + 3 * out_dim)
    cost = pl.CostEstimate(flops=flops,
                           transcendentals=padded * hid,      # tanh
                           bytes_accessed=bytes_accessed)

    out = pl.pallas_call(
        _cat_nonlin_kernel,
        out_shape=jax.ShapeDtypeStruct((padded, out_dim), args.dtype),
        grid=grid,
        in_specs=[
            pl.BlockSpec((tb, in_dim), lambda i: (i, 0)),       # x: streamed
            pl.BlockSpec((hid, in_dim), lambda i: (0, 0)),      # w1: resident
            pl.BlockSpec((1, hid), lambda i: (0, 0)),           # b1: resident
            pl.BlockSpec((out_dim, hid), lambda i: (0, 0)),     # w2: resident
            pl.BlockSpec((1, out_dim), lambda i: (0, 0)),       # b2: resident
            pl.BlockSpec((1, out_dim), lambda i: (0, 0)),       # gamma
            pl.BlockSpec((1, out_dim), lambda i: (0, 0)),       # beta
        ],
        out_specs=pl.BlockSpec((tb, out_dim), lambda i: (i, 0)),
        compiler_params=pltpu.CompilerParams(
            dimension_semantics=("parallel",)),
        cost_estimate=cost,
    )(
        x,
        w1,                      # untransposed; kernel contracts dim 1 (NT matmul)
        b1.reshape(1, -1),
        w2,
        b2.reshape(1, -1),
        gamma.reshape(1, -1),
        beta.reshape(1, -1),
    )
    return out[:b_rows]


def _reference(args, w1, b1, w2, b2, gamma, beta, *, arit=2):
    n, dim = args.shape
    x = args.reshape(n // 2, 2 * dim) if arit == 2 else args
    h = jnp.tanh(x @ w1.T + b1)
    z = h @ w2.T + b2
    mean = jnp.mean(z, axis=-1, keepdims=True)
    var = jnp.mean((z - mean) ** 2, axis=-1, keepdims=True)
    return (z - mean) / jnp.sqrt(var + LN_EPS) * gamma + beta


if __name__ == "__main__":
    dim = 32
    arit = 2
    n_rows = 8                      # args: (8, 32) -> paired view -> (4, 64)

    key = jax.random.PRNGKey(0)
    k_args, k_w1, k_b1, k_w2, k_b2 = jax.random.split(key, 5)

    args = jax.random.normal(k_args, (n_rows, dim), dtype=jnp.float32)

    # deterministic parameter init (PyTorch Linear shapes / bounds)
    bound1 = 1.0 / (arit * dim) ** 0.5
    w1 = jax.random.uniform(k_w1, (2 * dim, arit * dim),
                            minval=-bound1, maxval=bound1, dtype=jnp.float32)
    b1 = jax.random.uniform(k_b1, (2 * dim,),
                            minval=-bound1, maxval=bound1, dtype=jnp.float32)
    bound2 = 1.0 / (2 * dim) ** 0.5
    w2 = jax.random.uniform(k_w2, (dim, 2 * dim),
                            minval=-bound2, maxval=bound2, dtype=jnp.float32)
    b2 = jax.random.uniform(k_b2, (dim,),
                            minval=-bound2, maxval=bound2, dtype=jnp.float32)
    gamma = jnp.ones((dim,), dtype=jnp.float32)   # LayerNorm affine init
    beta = jnp.zeros((dim,), dtype=jnp.float32)

    out = cat_and_nonlinear_binary(args, w1, b1, w2, b2, gamma, beta, arit=arit)
    out = jax.block_until_ready(out)

    ref = _reference(args, w1, b1, w2, b2, gamma, beta, arit=arit)
    assert out.shape == (n_rows // 2, dim)
    assert jnp.allclose(out, ref, atol=1e-5, rtol=1e-5)

    print("KERNEL_OK")
</pallas_src>

<mosaic_0001>
module attributes {stable_mosaic.version = 11 : i64} {
  func.func @_cat_nonlin_kernel(%arg0: i32, %arg1: memref<8x64xf32, #tpu.memory_space<vmem>>, %arg2: memref<64x64xf32, #tpu.memory_space<vmem>>, %arg3: memref<1x64xf32, #tpu.memory_space<vmem>>, %arg4: memref<32x64xf32, #tpu.memory_space<vmem>>, %arg5: memref<1x32xf32, #tpu.memory_space<vmem>>, %arg6: memref<1x32xf32, #tpu.memory_space<vmem>>, %arg7: memref<1x32xf32, #tpu.memory_space<vmem>>, %arg8: memref<8x32xf32, #tpu.memory_space<vmem>>) attributes {dimension_semantics = [#tpu.dimension_semantics<parallel>], iteration_bounds = array<i64: 1>, scalar_prefetch = 0 : i64, scratch_operands = 0 : i64, tpu.core_type = #tpu.core_type<tc>, window_params = [{transform_indices = @transform_0, window_bounds = array<i64: 8, 64>}, {pipeline_mode = #tpu.pipeline_mode<synchronous>, transform_indices = @transform_1, window_bounds = array<i64: 64, 64>}, {pipeline_mode = #tpu.pipeline_mode<synchronous>, transform_indices = @transform_2, window_bounds = array<i64: 1, 64>}, {pipeline_mode = #tpu.pipeline_mode<synchronous>, transform_indices = @transform_3, window_bounds = array<i64: 32, 64>}, {pipeline_mode = #tpu.pipeline_mode<synchronous>, transform_indices = @transform_4, window_bounds = array<i64: 1, 32>}, {pipeline_mode = #tpu.pipeline_mode<synchronous>, transform_indices = @transform_5, window_bounds = array<i64: 1, 32>}, {pipeline_mode = #tpu.pipeline_mode<synchronous>, transform_indices = @transform_6, window_bounds = array<i64: 1, 32>}, {transform_indices = @transform_7, window_bounds = array<i64: 8, 32>}]} {
    %c0 = arith.constant 0 : index
    %c0_0 = arith.constant 0 : index
    %0 = vector.load %arg1[%c0, %c0_0] : memref<8x64xf32, #tpu.memory_space<vmem>>, vector<8x64xf32>
    %c0_1 = arith.constant 0 : index
    %c0_2 = arith.constant 0 : index
    %1 = vector.load %arg2[%c0_1, %c0_2] : memref<64x64xf32, #tpu.memory_space<vmem>>, vector<64x64xf32>
    %c0_3 = arith.constant 0 : index
    %c0_4 = arith.constant 0 : index
    %2 = vector.load %arg3[%c0_3, %c0_4] : memref<1x64xf32, #tpu.memory_space<vmem>>, vector<1x64xf32>
    %c0_5 = arith.constant 0 : index
    %c0_6 = arith.constant 0 : index
    %3 = vector.load %arg4[%c0_5, %c0_6] : memref<32x64xf32, #tpu.memory_space<vmem>>, vector<32x64xf32>
    %c0_7 = arith.constant 0 : index
    %c0_8 = arith.constant 0 : index
    %4 = vector.load %arg5[%c0_7, %c0_8] : memref<1x32xf32, #tpu.memory_space<vmem>>, vector<1x32xf32>
    %c0_9 = arith.constant 0 : index
    %c0_10 = arith.constant 0 : index
    %5 = vector.load %arg6[%c0_9, %c0_10] : memref<1x32xf32, #tpu.memory_space<vmem>>, vector<1x32xf32>
    %c0_11 = arith.constant 0 : index
    %c0_12 = arith.constant 0 : index
    %6 = vector.load %arg7[%c0_11, %c0_12] : memref<1x32xf32, #tpu.memory_space<vmem>>, vector<1x32xf32>
    %cst = arith.constant dense<0.000000e+00> : vector<8x64xf32>
    %7 = tpu.matmul %0, %1, %cst {dimension_numbers = #tpu.dot_dimension_numbers<[1], [1], [0], [0], [0, 0, 1, 0], [], []>} : vector<8x64xf32>, vector<64x64xf32>, vector<8x64xf32> -> vector<8x64xf32>
    %8 = vector.broadcast %2 : vector<1x64xf32> to vector<8x64xf32>
    %9 = arith.addf %7, %8 : vector<8x64xf32>
    %10 = math.tanh %9 : vector<8x64xf32>
    %cst_13 = arith.constant dense<0.000000e+00> : vector<8x32xf32>
    %11 = tpu.matmul %10, %3, %cst_13 {dimension_numbers = #tpu.dot_dimension_numbers<[1], [1], [0], [0], [0, 0, 1, 0], [], []>} : vector<8x64xf32>, vector<32x64xf32>, vector<8x32xf32> -> vector<8x32xf32>
    %12 = vector.broadcast %4 : vector<1x32xf32> to vector<8x32xf32>
    %13 = arith.addf %11, %12 : vector<8x32xf32>
    %cst_14 = arith.constant dense<0.000000e+00> : vector<8xf32>
    %14 = vector.multi_reduction <add>, %13, %cst_14 [1] : vector<8x32xf32> to vector<8xf32>
    %15 = vector.shape_cast %14 : vector<8xf32> to vector<8x1xf32>
    %cst_15 = arith.constant 3.200000e+01 : f32
    %16 = vector.broadcast %cst_15 : f32 to vector<8x1xf32>
    %17 = arith.divf %15, %16 : vector<8x1xf32>
    %18 = vector.broadcast %17 : vector<8x1xf32> to vector<8x32xf32>
    %19 = arith.subf %13, %18 : vector<8x32xf32>
    %20 = arith.mulf %19, %19 : vector<8x32xf32>
    %cst_16 = arith.constant dense<0.000000e+00> : vector<8xf32>
    %21 = vector.multi_reduction <add>, %20, %cst_16 [1] : vector<8x32xf32> to vector<8xf32>
    %22 = vector.shape_cast %21 : vector<8xf32> to vector<8x1xf32>
    %cst_17 = arith.constant 3.200000e+01 : f32
    %23 = vector.broadcast %cst_17 : f32 to vector<8x1xf32>
    %24 = arith.divf %22, %23 : vector<8x1xf32>
    %cst_18 = arith.constant 9.99999974E-6 : f32
    %25 = vector.broadcast %cst_18 : f32 to vector<8x1xf32>
    %26 = arith.addf %24, %25 : vector<8x1xf32>
    %27 = math.rsqrt %26 : vector<8x1xf32>
    %28 = vector.broadcast %27 : vector<8x1xf32> to vector<8x32xf32>
    %29 = arith.mulf %19, %28 : vector<8x32xf32>
    %30 = vector.broadcast %5 : vector<1x32xf32> to vector<8x32xf32>
    %31 = arith.mulf %29, %30 : vector<8x32xf32>
    %32 = vector.broadcast %6 : vector<1x32xf32> to vector<8x32xf32>
    %33 = arith.addf %31, %32 : vector<8x32xf32>
    %c0_19 = arith.constant 0 : index
    %c0_20 = arith.constant 0 : index
    %34 = vector.load %arg8[%c0_19, %c0_20] : memref<8x32xf32, #tpu.memory_space<vmem>>, vector<8x32xf32>
    tpu.vector_store %arg8[%c0_19, %c0_20], %33 {strides = array<i32>} : memref<8x32xf32, #tpu.memory_space<vmem>>, vector<8x32xf32>,
    return
  }
  func.func @transform_0(%arg0: i32) -> (i32, i32) {
    %c0_i32 = arith.constant 0 : i32
    %c0_i32_0 = arith.constant 0 : i32
    return %arg0, %c0_i32 : i32, i32
  }
  func.func @transform_1(%arg0: i32) -> (i32, i32) {
    %c0_i32 = arith.constant 0 : i32
    %c0_i32_0 = arith.constant 0 : i32
    %c0_i32_1 = arith.constant 0 : i32
    return %c0_i32, %c0_i32_0 : i32, i32
  }
  func.func @transform_2(%arg0: i32) -> (i32, i32) {
    %c0_i32 = arith.constant 0 : i32
    %c0_i32_0 = arith.constant 0 : i32
    %c0_i32_1 = arith.constant 0 : i32
    return %c0_i32, %c0_i32_0 : i32, i32
  }
  func.func @transform_3(%arg0: i32) -> (i32, i32) {
    %c0_i32 = arith.constant 0 : i32
    %c0_i32_0 = arith.constant 0 : i32
    %c0_i32_1 = arith.constant 0 : i32
    return %c0_i32, %c0_i32_0 : i32, i32
  }
  func.func @transform_4(%arg0: i32) -> (i32, i32) {
    %c0_i32 = arith.constant 0 : i32
    %c0_i32_0 = arith.constant 0 : i32
    %c0_i32_1 = arith.constant 0 : i32
    return %c0_i32, %c0_i32_0 : i32, i32
  }
  func.func @transform_5(%arg0: i32) -> (i32, i32) {
    %c0_i32 = arith.constant 0 : i32
    %c0_i32_0 = arith.constant 0 : i32
    %c0_i32_1 = arith.constant 0 : i32
    return %c0_i32, %c0_i32_0 : i32, i32
  }
  func.func @transform_6(%arg0: i32) -> (i32, i32) {
    %c0_i32 = arith.constant 0 : i32
    %c0_i32_0 = arith.constant 0 : i32
    %c0_i32_1 = arith.constant 0 : i32
    return %c0_i32, %c0_i32_0 : i32, i32
  }
  func.func @transform_7(%arg0: i32) -> (i32, i32) {
    %c0_i32 = arith.constant 0 : i32
    %c0_i32_0 = arith.constant 0 : i32
    return %arg0, %c0_i32 : i32, i32
  }
}

</mosaic_0001>

<llo_original>
// kernel: cat_and_nonlinear_binary.1
$region0: #{cat_and_nonlinear_binary.1}
  #allocation0 [shape = 'u32[]', space=smem, size = 0x4, offset = 0x4, fixed_abs, tag = 'smem constant byte address 0x4 - core index']
  #allocation1 [shape = 'u32[72,128]{1,0:T(1,128)}', space=vmem, size = 0x9000, scoped, tag = 'internal scratch']
  %s0 = inlined_call_operand.vmem [shape: f32[8,64], index: 0, kind: input, shape index: {}]
  %s1 = inlined_call_operand.hbm [shape: f32[64,64], index: 1, kind: input, shape index: {}]
  %s2 = inlined_call_operand.vmem [shape: f32[1,64], index: 2, kind: input, shape index: {}]
  %s3 = inlined_call_operand.hbm [shape: f32[32,64], index: 3, kind: input, shape index: {}]
  %s4 = inlined_call_operand.vmem [shape: f32[1,32], index: 4, kind: input, shape index: {}]
  %s5 = inlined_call_operand.vmem [shape: f32[1,32], index: 5, kind: input, shape index: {}]
  %s6 = inlined_call_operand.vmem [shape: f32[1,32], index: 6, kind: input, shape index: {}]
  %s7 = inlined_call_operand.vmem [shape: f32[8,32], index: 7, kind: output, shape index: {}]
  %s8 = sld [smem:[#allocation0]]
  $region46: #{cat_and_nonlinear_binary.1} parent=0
    _
  %s10 = ssub.s32 1, %s8
  %s11 = scalar_select 0, %s10, %s8
  $region1: #{cat_and_nonlinear_binary.1} parent=0
    #allocation2 [shape = 'u8[32768]{0}', space=vmem, size = 0x8000, scoped, tag = 'input window, operand 1, single buffered']
    #allocation3 [shape = 's32[1]{0}', space=sflag, size = 0x4, scoped, tag = 'scoped memory for cat_and_nonlinear_binary.1']
    #allocation4 [shape = 'u8[16384]{0}', space=vmem, size = 0x4000, scoped, tag = 'input window, operand 3, single buffered']
    #allocation5 [shape = 's32[1]{0}', space=sflag, size = 0x4, scoped, tag = 'scoped memory for cat_and_nonlinear_binary.1']
    %12 = vsyncpa [#allocation3], 0
    %13 = vsyncpa [#allocation5], 0
    // Predicated region
    $region2: #{cat_and_nonlinear_binary.1} parent=1 // pred_check
      _
    $region3: #{cat_and_nonlinear_binary.1} parent=1 // pred_check_branch
      %15 = sbr.rel (0) target = $region5
    $region4: #{cat_and_nonlinear_binary.1} parent=1 // pred_region
      _
    $region5: #{cat_and_nonlinear_binary.1} parent=1 // pred_fallthru
      _
    // Predicated region
    $region6: #{cat_and_nonlinear_binary.1} parent=1 // pred_check
      _
    $region7: #{cat_and_nonlinear_binary.1} parent=1 // pred_check_branch
      %17 = sbr.rel (0) target = $region9
    $region8: #{cat_and_nonlinear_binary.1} parent=1 // pred_region
      %19 = vsyncadd [#allocation3], 0
      %s20 = sshll.u32 %s1, 4
      %s21 = int_to_ptr.hbm [resolvable:$true] %s20
      %s22 = sshll.u32 [#allocation2], 4
      %s23 = int_to_ptr.vmem [resolvable:$true] %s22
      %28 = dma.hbm_to_vmem [thread:$0]  %s21, 1024, %s23, [#allocation3], 128, 128, 8
    $region9: #{cat_and_nonlinear_binary.1} parent=1 // pred_fallthru
      _
    // Predicated region
    $region10: #{cat_and_nonlinear_binary.1} parent=1 // pred_check
      _
    $region11: #{cat_and_nonlinear_binary.1} parent=1 // pred_check_branch
      %30 = sbr.rel (0) target = $region13
    $region12: #{cat_and_nonlinear_binary.1} parent=1 // pred_region
      _
    $region13: #{cat_and_nonlinear_binary.1} parent=1 // pred_fallthru
      _
    // Predicated region
    $region14: #{cat_and_nonlinear_binary.1} parent=1 // pred_check
      _
    $region15: #{cat_and_nonlinear_binary.1} parent=1 // pred_check_branch
      %32 = sbr.rel (0) target = $region17
    $region16: #{cat_and_nonlinear_binary.1} parent=1 // pred_region
      %34 = vsyncadd [#allocation5], 0
      %s35 = sshll.u32 %s3, 4
      %s36 = int_to_ptr.hbm [resolvable:$true] %s35
      %s37 = sshll.u32 [#allocation4], 4
      %s38 = int_to_ptr.vmem [resolvable:$true] %s37
      %43 = dma.hbm_to_vmem [thread:$0]  %s36, 512, %s38, [#allocation5], 128, 128, 8
    $region17: #{cat_and_nonlinear_binary.1} parent=1 // pred_fallthru
      _
    // Predicated region
    $region18: #{cat_and_nonlinear_binary.1} parent=1 // pred_check
      _
    $region19: #{cat_and_nonlinear_binary.1} parent=1 // pred_check_branch
      %45 = sbr.rel (0) target = $region21
    $region20: #{cat_and_nonlinear_binary.1} parent=1 // pred_region
      _
    $region21: #{cat_and_nonlinear_binary.1} parent=1 // pred_fallthru
      _
    // Predicated region
    $region22: #{cat_and_nonlinear_binary.1} parent=1 // pred_check
      _
    $region23: #{cat_and_nonlinear_binary.1} parent=1 // pred_check_branch
      %47 = sbr.rel (0) target = $region25
    $region24: #{cat_and_nonlinear_binary.1} parent=1 // pred_region
      _
    $region25: #{cat_and_nonlinear_binary.1} parent=1 // pred_fallthru
      _
    // Predicated region
    $region26: #{cat_and_nonlinear_binary.1} parent=1 // pred_check
      _
    $region27: #{cat_and_nonlinear_binary.1} parent=1 // pred_check_branch
      %49 = sbr.rel (0) target = $region29
    $region28: #{cat_and_nonlinear_binary.1} parent=1 // pred_region
      _
    $region29: #{cat_and_nonlinear_binary.1} parent=1 // pred_fallthru
      _
    // Predicated region
    $region30: #{cat_and_nonlinear_binary.1} parent=1 // pred_check
      _
    $region31: #{cat_and_nonlinear_binary.1} parent=1 // pred_check_branch
      %51 = sbr.rel (0) target = $region33
    $region32: #{cat_and_nonlinear_binary.1} parent=1 // pred_region
      %53 = dma.done [#allocation3], 1024
    $region33: #{cat_and_nonlinear_binary.1} parent=1 // pred_fallthru
      _
    // Predicated region
    $region34: #{cat_and_nonlinear_binary.1} parent=1 // pred_check
      _
    $region35: #{cat_and_nonlinear_binary.1} parent=1 // pred_check_branch
      %55 = sbr.rel (0) target = $region37
    $region36: #{cat_and_nonlinear_binary.1} parent=1 // pred_region
      %57 = dma.done [#allocation5], 512
    $region37: #{cat_and_nonlinear_binary.1} parent=1 // pred_fallthru
      _
    %v58 = vld [vmem:[%s0] sm:$0xff]
    %v59 = vld [vmem:[#allocation2] sm:$0xff]
    %v60 = vld [vmem:[#allocation2 + $0x8] sm:$0xff]
    %v61 = vld [vmem:[#allocation2 + $0x10] sm:$0xff]
    %v62 = vld [vmem:[#allocation2 + $0x18] sm:$0xff]
    %v63 = vld [vmem:[#allocation2 + $0x20] sm:$0xff]
    %v64 = vld [vmem:[#allocation2 + $0x28] sm:$0xff]
    %v65 = vld [vmem:[#allocation2 + $0x30] sm:$0xff]
    %v66 = vld [vmem:[#allocation2 + $0x38] sm:$0xff]
    %v67 = vld [vmem:[%s2] sm:$0x1]
    %v68 = vld [vmem:[#allocation4] sm:$0xff]
    %v69 = vld [vmem:[#allocation4 + $0x8] sm:$0xff]
    %v70 = vld [vmem:[#allocation4 + $0x10] sm:$0xff]
    %v71 = vld [vmem:[#allocation4 + $0x18] sm:$0xff]
    %v72 = vld [vmem:[%s4] sm:$0x1]
    %v73 = vld [vmem:[%s5] sm:$0x1]
    %v74 = vld [vmem:[%s6] sm:$0x1]
    %v76 = vperm.slane %v67, 0
    %vm78 = vcmask 523264
    %v80 = vsel %vm78, %v58, 0
    %v83 = vsel %vm78, %v59, 0
    %v86 = vsel %vm78, %v60, 0
    %v89 = vsel %vm78, %v61, 0
    %v92 = vsel %vm78, %v62, 0
    %v95 = vsel %vm78, %v63, 0
    %v98 = vsel %vm78, %v64, 0
    %v101 = vsel %vm78, %v65, 0
    %v104 = vsel %vm78, %v66, 0
    %106 = vmatpush.xpose.msra.mxu0 0.0
    %107 = vmatpush.xpose.msra.mxu0 0.0
    %108 = vmatpush.xpose.msra.mxu0 0.0
    %109 = vmatpush.xpose.msra.mxu0 0.0
    %110 = vmatpush.xpose.msra.mxu0 0.0
    %111 = vmatpush.xpose.msra.mxu0 0.0
    %112 = vmatpush.xpose.msra.mxu0 0.0
    %113 = vmatpush.xpose.msra.mxu0 0.0
    %114 = vmatpush.xpose.msra.mxu0 %v104
    %115 = vmatpush.xpose.msra.mxu0 %v101
    %116 = vmatpush.xpose.msra.mxu0 %v98
    %117 = vmatpush.xpose.msra.mxu0 %v95
    %118 = vmatpush.xpose.msra.mxu0 %v92
    %119 = vmatpush.xpose.msra.mxu0 %v89
    %120 = vmatpush.xpose.msra.mxu0 %v86
    %121 = vmatpush.xpose.msra.mxu0 %v83
    %122 = vmatmul.f32.gmra.mxu0 %v80
    %v123 = vpop.f32.mrf.mxu0
    %v124 = vadd.f32 %v76, %v123
    %125 = vdwg.mxu0
    %v126 = vtanh.pop %v124
    %v128 = vperm.slane %v72, 0
    %v131 = vsel %vm78, %v126, 0
    %v134 = vsel %vm78, %v68, 0
    %v137 = vsel %vm78, %v69, 0
    %v140 = vsel %vm78, %v70, 0
    %v143 = vsel %vm78, %v71, 0
    %145 = vmatpush.xpose.msra.mxu0 0.0
    %146 = vmatpush.xpose.msra.mxu0 0.0
    %147 = vmatpush.xpose.msra.mxu0 0.0
    %148 = vmatpush.xpose.msra.mxu0 0.0
    %149 = vmatpush.xpose.msra.mxu0 0.0
    %150 = vmatpush.xpose.msra.mxu0 0.0
    %151 = vmatpush.xpose.msra.mxu0 0.0
    %152 = vmatpush.xpose.msra.mxu0 0.0
    %153 = vmatpush.xpose.msra.mxu0 0.0
    %154 = vmatpush.xpose.msra.mxu0 0.0
    %155 = vmatpush.xpose.msra.mxu0 0.0
    %156 = vmatpush.xpose.msra.mxu0 0.0
    %157 = vmatpush.xpose.msra.mxu0 %v143
    %158 = vmatpush.xpose.msra.mxu0 %v140
    %159 = vmatpush.xpose.msra.mxu0 %v137
    %160 = vmatpush.xpose.msra.mxu0 %v134
    %161 = vmatmul.f32.gmra.mxu0 %v131
    %v162 = vpop.f32.mrf.mxu0
    %v163 = vadd.f32 %v128, %v162
    %164 = vdwg.mxu0
    %vm165 = vcmask 261120
    %v166 = vsel %vm165, %v163, 0.0
    %167 = vadd.xlane.f32.xlu0 %v166
    %v168 = vpop.xlane.xlu0 %167
    %v169 = vrcp.pop 32.0
    %v170 = vmul.f32 32.0, %v169
    %v171 = vsub.f32 1.0, %v170
    %v172 = vmul.f32 %v169, %v171
    %v173 = vadd.f32 %v169, %v172
    %vm174 = vweird.f32 %v169
    %v175 = vsel %vm174, %v169, %v173
    %v176 = vmul.f32 %v168, %v175
    %v177 = vsub.f32 %v163, %v176
    %v178 = vmul.f32 %v177, %v177
    %v179 = vsel %vm165, %v178, 0.0
    %180 = vadd.xlane.f32.xlu0 %v179
    %v181 = vpop.xlane.xlu0 %180
    %v182 = vmul.f32 %v181, %v175
    %v183 = vadd.f32 %v182, 1e-05
    %v184 = vrsqrt.pop %v183
    %v185 = vmul.f32 %v184, %v183
    %v186 = vmul.f32 %v185, %v184
    %v187 = vmul.f32 0.5, %v186
    %v188 = vsub.f32 1.5, %v187
    %v189 = vmul.f32 %v184, %v188
    %vm190 = vweird.f32 %v183
    %vm191 = vweird.f32 %v184
    %vm192 = vmor %vm190, %vm191
    %v193 = vsel %vm192, %v184, %v189
    %v194 = vmul.f32 %v177, %v193
    %v196 = vperm.slane %v73, 0
    %v198 = vmul.f32 %v194, %v196
    %v200 = vperm.slane %v74, 0
    %v202 = vadd.f32 %v198, %v200
    %203 = vst.msk [vmem:[%s7] sm:$0xff] %vm165, %v202
    // Predicated region
    $region38: #{cat_and_nonlinear_binary.1} parent=1 // pred_check
      _
    $region39: #{cat_and_nonlinear_binary.1} parent=1 // pred_check_branch
      %205 = sbr.rel (0) target = $region41
    $region40: #{cat_and_nonlinear_binary.1} parent=1 // pred_region
      _
    $region41: #{cat_and_nonlinear_binary.1} parent=1 // pred_fallthru
      _
    // Predicated region
    $region42: #{cat_and_nonlinear_binary.1} parent=1 // pred_check
      _
    $region43: #{cat_and_nonlinear_binary.1} parent=1 // pred_check_branch
      %207 = sbr.rel (0) target = $region45
    $region44: #{cat_and_nonlinear_binary.1} parent=1 // pred_region
      _
    $region45: #{cat_and_nonlinear_binary.1} parent=1 // pred_fallthru
      _
    %208 = vsyncpa [#allocation3], 1
    %209 = vsyncpa [#allocation5], 1

</llo_original>
